<compile_context>
chip_gen: v7x
topology: tpu7x:2x2x1
jax: 0.10.0
libtpu: 0.0.40
codegen_flags: <defaults>
</compile_context>

<pallas_src>
import functools

import jax
import jax.numpy as jnp
import numpy as np
from jax.experimental import pallas as pl
from jax.experimental.pallas import tpu as pltpu


def _round_up(x: int, m: int) -> int:
    return ((x + m - 1) // m) * m


# --------------------------------------------------------------------------
# Path 1: equal-size bins (L % D == 0) -> pure reduction, HBM-roofline bound.
# --------------------------------------------------------------------------
def _mean_reduce_kernel(feat_ref, out_ref, *, inv_bin: float):
    # feat_ref: (TM, D, bin) in the input dtype; out_ref: (TM, D) f32
    x = feat_ref[...].astype(jnp.float32)
    out_ref[...] = (jnp.sum(x, axis=-1) * inv_bin).astype(out_ref.dtype)


# --------------------------------------------------------------------------
# Path 2: ragged bins -> MXU matmul with 1/count folded into the mask.
# --------------------------------------------------------------------------
def _mean_matmul_kernel(feat_ref, mask_ref, out_ref):
    # feat_ref: (TM, L), mask_ref: (L, D_pad) (mask / count, zero-padded cols)
    out_ref[...] = jnp.dot(
        feat_ref[...], mask_ref[...], preferred_element_type=jnp.float32
    ).astype(out_ref.dtype)


def _adaptive_pool_scaled_mask(length: int, out_dim: int, pad_dim: int, dtype):
    """(L, pad_dim) mask with value 1/bin_count inside each adaptive bin,
    matching torch.nn.functional.adaptive_avg_pool1d boundaries; columns
    beyond out_dim are zero (lane padding)."""
    j = np.arange(out_dim)
    starts = (j * length) // out_dim                 # floor(j*L/D)
    ends = -((-(j + 1) * length) // out_dim)         # ceil((j+1)*L/D)
    l = np.arange(length)[:, None]                   # (L, 1)
    member = (l >= starts[None, :]) & (l < ends[None, :])
    counts = (ends - starts).astype(np.float64)[None, :]
    mask = member.astype(np.float64) / counts        # (L, D)
    if pad_dim > out_dim:
        mask = np.concatenate(
            [mask, np.zeros((length, pad_dim - out_dim))], axis=1
        )
    return jnp.asarray(mask, dtype=dtype)


def mean_mapper(features: jax.Array, preprocessing_dim: int,
                *, compute_dtype=jnp.bfloat16) -> jax.Array:
    """features: (N, L) -> (N, preprocessing_dim) float32, matching
    F.adaptive_avg_pool1d(features.reshape(N, 1, L), D).squeeze(1)."""
    n, length = features.shape
    d = int(preprocessing_dim)

    # Row tile: 256 is MXU/sublane friendly; for small N use the full extent
    # (block dim equal to the full array dim always satisfies tiling rules).
    tm = min(256, n)
    grid = (pl.cdiv(n, tm),)
    cparams = pltpu.CompilerParams(dimension_semantics=("parallel",))

    if length % d == 0:
        # Equal-size contiguous bins: reshape (free, contiguous) and reduce.
        binsz = length // d
        feat3 = features.reshape(n, d, binsz)
        out = pl.pallas_call(
            functools.partial(_mean_reduce_kernel, inv_bin=1.0 / binsz),
            out_shape=jax.ShapeDtypeStruct((n, d), jnp.float32),
            grid=grid,
            in_specs=[pl.BlockSpec((tm, d, binsz), lambda i: (i, 0, 0))],
            out_specs=pl.BlockSpec((tm, d), lambda i: (i, 0)),
            compiler_params=cparams,
        )(feat3)
        return out

    # Ragged bins: dense scaled mask, bf16 operands, f32 accumulation.
    # L is small for PatchCore (~1-2K), so it is kept as a single K block;
    # the mask stays resident in VMEM (constant index_map across the grid).
    d_pad = _round_up(d, 128)  # lane-dense output stores
    mask = _adaptive_pool_scaled_mask(length, d, d_pad, compute_dtype)
    feats = features.astype(compute_dtype)
    out = pl.pallas_call(
        _mean_matmul_kernel,
        out_shape=jax.ShapeDtypeStruct((n, d_pad), jnp.float32),
        grid=grid,
        in_specs=[
            pl.BlockSpec((tm, length), lambda i: (i, 0)),
            pl.BlockSpec((length, d_pad), lambda i: (0, 0)),  # resident
        ],
        out_specs=pl.BlockSpec((tm, d_pad), lambda i: (i, 0)),
        compiler_params=cparams,
    )(feats, mask)
    return out[:, :d]


def mean_mapper_reference(features: jax.Array, preprocessing_dim: int) -> jax.Array:
    """Pure-JAX reference of F.adaptive_avg_pool1d for verification."""
    n, length = features.shape
    outs = []
    for j in range(preprocessing_dim):
        start = (j * length) // preprocessing_dim
        end = -((-(j + 1) * length) // preprocessing_dim)
        outs.append(jnp.mean(features[:, start:end], axis=1))
    return jnp.stack(outs, axis=1)


if __name__ == "__main__":
    key = jax.random.PRNGKey(0)
    # NCHW feature map, flattened exactly like torch .reshape(len(x), -1)
    N, C, H, W = 2, 4, 16, 16
    x_nchw = jax.random.normal(key, (N, C, H, W), dtype=jnp.float32)
    features = x_nchw.reshape(N, -1)  # (N, L) with L = C*H*W = 1024

    # Case 1: L % D == 0 -> reduction path (f32 accumulate), tight tolerance.
    D1 = 32
    out1 = jax.block_until_ready(mean_mapper(features, D1))
    ref1 = mean_mapper_reference(features, D1)
    assert out1.shape == (N, D1), out1.shape
    np.testing.assert_allclose(np.asarray(out1), np.asarray(ref1),
                               rtol=1e-5, atol=1e-5)

    # Case 2: ragged bins -> scaled-mask MXU matmul (bf16 in, f32 acc).
    D2 = 24
    out2 = jax.block_until_ready(mean_mapper(features, D2))
    ref2 = mean_mapper_reference(features, D2)
    assert out2.shape == (N, D2), out2.shape
    np.testing.assert_allclose(np.asarray(out2), np.asarray(ref2),
                               rtol=2e-2, atol=1e-2)

    print("KERNEL_OK")
</pallas_src>

<mosaic_0001>
module attributes {stable_mosaic.version = 11 : i64} {
  func.func @_mean_reduce_kernel(%arg0: i32, %arg1: memref<2x32x32xf32, #tpu.memory_space<vmem>>, %arg2: memref<2x32xf32, #tpu.memory_space<vmem>>) attributes {dimension_semantics = [#tpu.dimension_semantics<parallel>], iteration_bounds = array<i64: 1>, scalar_prefetch = 0 : i64, scratch_operands = 0 : i64, tpu.core_type = #tpu.core_type<tc>, window_params = [{transform_indices = @transform_0, window_bounds = array<i64: 2, 32, 32>}, {transform_indices = @transform_1, window_bounds = array<i64: 2, 32>}]} {
    %c0 = arith.constant 0 : index
    %c0_0 = arith.constant 0 : index
    %c0_1 = arith.constant 0 : index
    %0 = vector.load %arg1[%c0, %c0_0, %c0_1] : memref<2x32x32xf32, #tpu.memory_space<vmem>>, vector<2x32x32xf32>
    %cst = arith.constant dense<0.000000e+00> : vector<2x32xf32>
    %1 = vector.multi_reduction <add>, %0, %cst [2] : vector<2x32x32xf32> to vector<2x32xf32>
    %cst_2 = arith.constant 3.125000e-02 : f32
    %2 = vector.broadcast %cst_2 : f32 to vector<2x32xf32>
    %3 = arith.mulf %1, %2 : vector<2x32xf32>
    %c0_3 = arith.constant 0 : index
    %c0_4 = arith.constant 0 : index
    %4 = vector.load %arg2[%c0_3, %c0_4] : memref<2x32xf32, #tpu.memory_space<vmem>>, vector<2x32xf32>
    tpu.vector_store %arg2[%c0_3, %c0_4], %3 {strides = array<i32>} : memref<2x32xf32, #tpu.memory_space<vmem>>, vector<2x32xf32>,
    return
  }
  func.func @transform_0(%arg0: i32) -> (i32, i32, i32) {
    %c0_i32 = arith.constant 0 : i32
    %c0_i32_0 = arith.constant 0 : i32
    %c0_i32_1 = arith.constant 0 : i32
    return %arg0, %c0_i32, %c0_i32_0 : i32, i32, i32
  }
  func.func @transform_1(%arg0: i32) -> (i32, i32) {
    %c0_i32 = arith.constant 0 : i32
    %c0_i32_0 = arith.constant 0 : i32
    return %arg0, %c0_i32 : i32, i32
  }
}

</mosaic_0001>

<llo_original>
// kernel: tpu_custom_call.1
$region0: #{tpu_custom_call.1}
  #allocation0 [shape = 'u32[]', space=smem, size = 0x4, offset = 0x4, fixed_abs, tag = 'smem constant byte address 0x4 - core index']
  #allocation1 [shape = 'u32[144,128]{1,0:T(1,128)}', space=vmem, size = 0x12000, scoped, tag = 'internal scratch']
  %s0 = inlined_call_operand.hbm [shape: f32[2,32,32], index: 0, kind: input, shape index: {}]
  %s1 = inlined_call_operand.hbm [shape: f32[2,32], index: 1, kind: output, shape index: {}]
  %s2 = sld [smem:[#allocation0]]
  $region18: #{tpu_custom_call.1} parent=0
    _
  %s4 = ssub.s32 1, %s2
  %s5 = scalar_select 0, %s4, %s2
  $region1: #{tpu_custom_call.1} parent=0
    #allocation2 [shape = 'u8[32768]{0}', space=vmem, size = 0x8000, scoped, tag = 'input window, operand 0, single buffered']
    #allocation3 [shape = 's32[1]{0}', space=sflag, size = 0x4, scoped, tag = 'scoped memory for tpu_custom_call.1']
    #allocation4 [shape = 's32[1]{0}', space=sflag, size = 0x4, scoped, tag = 'scoped memory for tpu_custom_call.1']
    #allocation5 [shape = 'u8[1024]{0}', space=vmem, size = 0x400, scoped, tag = 'output window, operand 0, single buffered']
    %6 = vsyncpa [#allocation3], 0
    %7 = vsyncpa [#allocation4], 0
    // Predicated region
    $region2: #{tpu_custom_call.1} parent=1 // pred_check
      _
    $region3: #{tpu_custom_call.1} parent=1 // pred_check_branch
      %9 = sbr.rel (0) target = $region5
    $region4: #{tpu_custom_call.1} parent=1 // pred_region
      %s11 = ssub.s32 1024, 1024
      %12 = vsyncadd [#allocation3], %s11
      %s13 = sshll.u32 [#allocation2], 4
      %s14 = int_to_ptr.vmem [resolvable:$true] %s13
      %19 = dma.hbm_to_vmem [thread:$0]  %s0, 1024, %s14, [#allocation3], 128, 128, 8
    $region5: #{tpu_custom_call.1} parent=1 // pred_fallthru
      _
    // Predicated region
    $region6: #{tpu_custom_call.1} parent=1 // pred_check
      _
    $region7: #{tpu_custom_call.1} parent=1 // pred_check_branch
      %21 = sbr.rel (0) target = $region9
    $region8: #{tpu_custom_call.1} parent=1 // pred_region
      %22 = dma.done [#allocation3], 1024
    $region9: #{tpu_custom_call.1} parent=1 // pred_fallthru
      _
    %v23 = vld [vmem:[#allocation2] sm:$0xff]
    %v24 = vld [vmem:[#allocation2 + $0x8] sm:$0xff]
    %v25 = vld [vmem:[#allocation2 + $0x10] sm:$0xff]
    %v26 = vld [vmem:[#allocation2 + $0x18] sm:$0xff]
    %v27 = vld [vmem:[#allocation2 + $0x20] sm:$0xff]
    %v28 = vld [vmem:[#allocation2 + $0x28] sm:$0xff]
    %v29 = vld [vmem:[#allocation2 + $0x30] sm:$0xff]
    %v30 = vld [vmem:[#allocation2 + $0x38] sm:$0xff]
    %vm31 = vcmask 261120
    %v32 = vsel %vm31, %v23, 0.0
    %33 = vadd.xlane.f32.xlu0 %v32
    %v34 = vpop.xlane.xlu0 %33
    %v35 = vsel %vm31, %v24, 0.0
    %36 = vadd.xlane.f32.xlu0 %v35
    %v37 = vpop.xlane.xlu0 %36
    %v38 = vsel %vm31, %v25, 0.0
    %39 = vadd.xlane.f32.xlu0 %v38
    %v40 = vpop.xlane.xlu0 %39
    %v41 = vsel %vm31, %v26, 0.0
    %42 = vadd.xlane.f32.xlu0 %v41
    %v43 = vpop.xlane.xlu0 %42
    %v44 = vsel %vm31, %v27, 0.0
    %45 = vadd.xlane.f32.xlu0 %v44
    %v46 = vpop.xlane.xlu0 %45
    %v47 = vsel %vm31, %v28, 0.0
    %48 = vadd.xlane.f32.xlu0 %v47
    %v49 = vpop.xlane.xlu0 %48
    %v50 = vsel %vm31, %v29, 0.0
    %51 = vadd.xlane.f32.xlu0 %v50
    %v52 = vpop.xlane.xlu0 %51
    %v53 = vsel %vm31, %v30, 0.0
    %54 = vadd.xlane.f32.xlu0 %v53
    %v55 = vpop.xlane.xlu0 %54
    %v56 = vmul.f32 %v34, 0.03125
    %v57 = vmul.f32 %v37, 0.03125
    %v58 = vmul.f32 %v40, 0.03125
    %v59 = vmul.f32 %v43, 0.03125
    %v60 = vmul.f32 %v46, 0.03125
    %v61 = vmul.f32 %v49, 0.03125
    %v62 = vmul.f32 %v52, 0.03125
    %v63 = vmul.f32 %v55, 0.03125
    %v72 = vlaneseq
    %v73 = vand.u32 %v72, 127
    %v74 = vlaneseq
    %v75 = vshrl.u32 %v74, 7
    %v76 = vsub.s32 %v73, %v75
    %v77 = vrot.slane %v56, %v76
    %v78 = vadd.s32 %v73, 4294967288
    %v79 = vlaneseq
    %v80 = vshrl.u32 %v79, 7
    %v81 = vsub.s32 %v78, %v80
    %v82 = vrot.slane %v57, %v81
    %vm83 = vcmask 130112
    %v84 = vsel %vm83, %v82, %v77
    %v85 = vadd.s32 %v73, 4294967280
    %v86 = vlaneseq
    %v87 = vshrl.u32 %v86, 7
    %v88 = vsub.s32 %v85, %v87
    %v89 = vrot.slane %v58, %v88
    %vm90 = vcmask 195712
    %v91 = vsel %vm90, %v89, %v84
    %v92 = vadd.s32 %v73, 4294967272
    %v93 = vlaneseq
    %v94 = vshrl.u32 %v93, 7
    %v95 = vsub.s32 %v92, %v94
    %v96 = vrot.slane %v59, %v95
    %vm97 = vcmask 261312
    %v98 = vsel %vm97, %v96, %v91
    %v99 = vlaneseq
    %v100 = vshrl.u32 %v99, 7
    %v101 = vsub.s32 %v73, %v100
    %v102 = vrot.slane %v60, %v101
    %v103 = vlaneseq
    %v104 = vshrl.u32 %v103, 7
    %v105 = vsub.s32 %v78, %v104
    %v106 = vrot.slane %v61, %v105
    %v107 = vsel %vm83, %v106, %v102
    %v108 = vlaneseq
    %v109 = vshrl.u32 %v108, 7
    %v110 = vsub.s32 %v85, %v109
    %v111 = vrot.slane %v62, %v110
    %v112 = vsel %vm90, %v111, %v107
    %v113 = vlaneseq
    %v114 = vshrl.u32 %v113, 7
    %v115 = vsub.s32 %v92, %v114
    %v116 = vrot.slane %v63, %v115
    %v117 = vsel %vm97, %v116, %v112
    %vm118 = vcmask 1041409
    %v119 = vsel %vm118, %v117, %v98
    %vm121 = vcmask 254976
    %122 = vst.msk [vmem:[#allocation5] sm:$0x3] %vm121, %v119
    // Predicated region
    $region10: #{tpu_custom_call.1} parent=1 // pred_check
      _
    $region11: #{tpu_custom_call.1} parent=1 // pred_check_branch
      %124 = sbr.rel (0) target = $region13
    $region12: #{tpu_custom_call.1} parent=1 // pred_region
      %s126 = ssub.s32 32, 32
      %127 = vsyncadd [#allocation4], %s126
      %s129 = sshll.u32 [#allocation5], 4
      %s130 = int_to_ptr.vmem [resolvable:$true] %s129
      %132 = dma.vmem_to_hbm [thread:$0]  %s130, 32, %s1, [#allocation4]
    $region13: #{tpu_custom_call.1} parent=1 // pred_fallthru
      _
    // Predicated region
    $region14: #{tpu_custom_call.1} parent=1 // pred_check
      _
    $region15: #{tpu_custom_call.1} parent=1 // pred_check_branch
      %134 = sbr.rel (0) target = $region17
    $region16: #{tpu_custom_call.1} parent=1 // pred_region
      %135 = dma.done [#allocation4], 32
    $region17: #{tpu_custom_call.1} parent=1 // pred_fallthru
      _
    %136 = vsyncpa [#allocation3], 1
    %137 = vsyncpa [#allocation4], 1

</llo_original>
